<compile_context>
chip_gen: v5e
topology: v5e:2x2
jax: 0.10.0
libtpu: 0.0.40
codegen_flags: <defaults>
</compile_context>

<pallas_src>
import jax
import jax.numpy as jnp
from jax import lax
from jax.experimental import pallas as pl
from jax.experimental.pallas import tpu as pltpu


_NEG_LARGE = -1e30  # finite mask value for padded vocab columns (avoid -inf -> NaN)


def _round_up(x, m):
    return ((x + m - 1) // m) * m


# ---------------------------------------------------------------------------
# Kernels
# ---------------------------------------------------------------------------
def _lse_kernel(x_ref, wt_ref, b_ref, lse_ref, m_ref, l_ref):
    """Pass 1: online logsumexp over vocab tiles. No logits written to HBM."""
    j = pl.program_id(1)

    @pl.when(j == 0)
    def _init():
        m_ref[...] = jnp.full_like(m_ref, -jnp.inf)
        l_ref[...] = jnp.zeros_like(l_ref)

    # (TM, D) @ (D, TV) -> (TM, TV) on the MXU, f32 accumulation.
    logits = lax.dot_general(
        x_ref[...], wt_ref[...],
        dimension_numbers=(((1,), (0,)), ((), ())),
        preferred_element_type=jnp.float32,
    ) + b_ref[...]

    m_prev = m_ref[...]
    m_new = jnp.maximum(m_prev, jnp.max(logits, axis=-1, keepdims=True))
    l_ref[...] = l_ref[...] * jnp.exp(m_prev - m_new) + jnp.sum(
        jnp.exp(logits - m_new), axis=-1, keepdims=True)
    m_ref[...] = m_new

    @pl.when(j == pl.num_programs(1) - 1)
    def _finalize():
        lse_ref[...] = m_ref[...] + jnp.log(l_ref[...])


def _logprob_kernel(x_ref, wt_ref, b_ref, lse_ref, o_ref):
    """Pass 2: recompute the logits tile and write logits - lse directly."""
    logits = lax.dot_general(
        x_ref[...], wt_ref[...],
        dimension_numbers=(((1,), (0,)), ((), ())),
        preferred_element_type=jnp.float32,
    ) + b_ref[...]
    o_ref[...] = (logits - lse_ref[...]).astype(o_ref.dtype)


# ---------------------------------------------------------------------------
# Tiling / VMEM budgeting
# ---------------------------------------------------------------------------
def _footprint_bytes(TM, TV, D, in_isz, out_isz):
    """Double-buffered block bytes + scratch + f32 logits temp (worst of 2 passes)."""
    blk = (TM * D + D * TV) * in_isz + TV * 4 + TM * 4 + TM * TV * out_isz
    return 2 * blk + 2 * TM * 4 + TM * TV * 4


def _select_tiles(N, V, D, in_isz, out_isz, tm, tv, budget_bytes):
    n8 = _round_up(N, 8)
    TM = min(tm, n8)
    # Ensure >= 2 row tiles when possible so the parallel row axis can use both
    # TensorCores on v7x.
    if TM == n8 and n8 >= 16:
        TM = _round_up(n8 // 2, 8)
    TV = min(tv, _round_up(V, 128))

    while _footprint_bytes(TM, TV, D, in_isz, out_isz) > budget_bytes and (TV > 128 or TM > 8):
        if TV > 128:
            TV = max(128, (TV // 2 // 128) * 128)
        else:
            TM = max(8, (TM // 2 // 8) * 8)
    return TM, TV


# ---------------------------------------------------------------------------
# Wrapper
# ---------------------------------------------------------------------------
def generator_forward(x, weight, bias, *, tm=512, tv=1024, mxu_dtype=None):
    """log_softmax(x @ weight.T + bias, axis=-1).

    x:      (B, S, D)
    weight: (V, D)  -- nn.Linear layout (transposed once, outside the kernel).
    bias:   (V,)
    mxu_dtype: optional dtype (e.g. jnp.bfloat16 on v6e/v7x) for the MXU
      operands only; accumulation and softmax math stay f32.
    """
    B, S, D = x.shape
    V = weight.shape[0]
    N = B * S

    out_dtype = x.dtype
    op_dtype = jnp.dtype(mxu_dtype) if mxu_dtype is not None else jnp.dtype(x.dtype)
    in_isz = op_dtype.itemsize
    out_isz = jnp.dtype(out_dtype).itemsize

    budget = 36 * 1024 * 1024  # conservative: fits v7x 64 MiB VMEM with headroom
    TM, TV = _select_tiles(N, V, D, in_isz, out_isz, tm, tv, budget)
    N_pad = _round_up(N, TM)
    V_pad = _round_up(V, TV)
    n_row_tiles = N_pad // TM
    n_voc_tiles = V_pad // TV

    # One-time layout prep (outside the kernel).
    x2d = x.reshape(N, D).astype(op_dtype)
    wt = jnp.transpose(weight).astype(op_dtype)          # (D, V)
    b1 = bias.astype(jnp.float32)
    if N_pad != N:
        x2d = jnp.pad(x2d, ((0, N_pad - N), (0, 0)))
    if V_pad != V:
        wt = jnp.pad(wt, ((0, 0), (0, V_pad - V)))
        b1 = jnp.pad(b1, (0, V_pad - V), constant_values=_NEG_LARGE)
    b2d = b1.reshape(1, V_pad)

    vmem_limit = int(min(
        max(_footprint_bytes(TM, TV, D, in_isz, out_isz) * 1.3, 32 * 1024 * 1024),
        48 * 1024 * 1024))

    grid = (n_row_tiles, n_voc_tiles)
    x_spec = pl.BlockSpec((TM, D), lambda i, j: (i, 0))
    w_spec = pl.BlockSpec((D, TV), lambda i, j: (0, j))
    b_spec = pl.BlockSpec((1, TV), lambda i, j: (0, j))
    lse_spec = pl.BlockSpec((TM, 1), lambda i, j: (i, 0))
    out_spec = pl.BlockSpec((TM, TV), lambda i, j: (i, j))

    w_stream_bytes = n_row_tiles * V_pad * D * in_isz

    # ---- Pass 1: per-row logsumexp only (no logits to HBM). ----
    cost1 = pl.CostEstimate(
        flops=2 * N_pad * D * V_pad,
        transcendentals=N_pad * V_pad + N_pad,
        bytes_accessed=N_pad * D * in_isz + w_stream_bytes + V_pad * 4 + N_pad * 4,
    )
    lse = pl.pallas_call(
        _lse_kernel,
        out_shape=jax.ShapeDtypeStruct((N_pad, 1), jnp.float32),
        grid_spec=pltpu.PrefetchScalarGridSpec(
            num_scalar_prefetch=0,
            grid=grid,
            in_specs=[x_spec, w_spec, b_spec],
            out_specs=lse_spec,
            scratch_shapes=[
                pltpu.VMEM((TM, 1), jnp.float32),   # running max
                pltpu.VMEM((TM, 1), jnp.float32),   # running sum of exp
            ],
        ),
        compiler_params=pltpu.CompilerParams(
            dimension_semantics=("parallel", "arbitrary"),
            vmem_limit_bytes=vmem_limit,
        ),
        cost_estimate=cost1,
    )(x2d, wt, b2d)

    # ---- Pass 2: recompute logits tile, write log-probs directly. ----
    cost2 = pl.CostEstimate(
        flops=2 * N_pad * D * V_pad + N_pad * V_pad,
        transcendentals=0,
        bytes_accessed=(N_pad * D * in_isz + w_stream_bytes + V_pad * 4
                        + N_pad * 4 + N_pad * V_pad * out_isz),
    )
    out = pl.pallas_call(
        _logprob_kernel,
        out_shape=jax.ShapeDtypeStruct((N_pad, V_pad), out_dtype),
        grid_spec=pltpu.PrefetchScalarGridSpec(
            num_scalar_prefetch=0,
            grid=grid,
            in_specs=[x_spec, w_spec, b_spec, lse_spec],
            out_specs=out_spec,
        ),
        compiler_params=pltpu.CompilerParams(
            dimension_semantics=("parallel", "parallel"),
            vmem_limit_bytes=vmem_limit,
        ),
        cost_estimate=cost2,
    )(x2d, wt, b2d, lse)

    out = out[:N, :V]
    return out.reshape(B, S, V)


if __name__ == "__main__":
    # Small shapes consistent with the module: d_model=32, vocab=128.
    B, S, D, V = 2, 8, 32, 128

    key = jax.random.PRNGKey(0)
    kx, kw, kb = jax.random.split(key, 3)

    # Deterministic parameter init (nn.Linear-style uniform bound 1/sqrt(D)).
    bound = 1.0 / (D ** 0.5)
    weight = jax.random.uniform(kw, (V, D), jnp.float32, -bound, bound)
    bias = jax.random.uniform(kb, (V,), jnp.float32, -bound, bound)
    x = jax.random.normal(kx, (B, S, D), jnp.float32)

    out = generator_forward(x, weight, bias)
    out = jax.block_until_ready(out)

    ref = jax.nn.log_softmax(x @ weight.T + bias, axis=-1)
    assert out.shape == (B, S, V)
    assert jnp.allclose(out, ref, atol=1e-5, rtol=1e-5)
    assert jnp.allclose(jnp.sum(jnp.exp(out), axis=-1), 1.0, atol=1e-4)

    # Exercise the padding path (non-divisible N and V).
    B2, S2, V2 = 2, 5, 100
    x2 = jax.random.normal(kx, (B2, S2, D), jnp.float32)
    w2 = jax.random.uniform(kw, (V2, D), jnp.float32, -bound, bound)
    b2 = jax.random.uniform(kb, (V2,), jnp.float32, -bound, bound)
    out2 = jax.block_until_ready(generator_forward(x2, w2, b2))
    ref2 = jax.nn.log_softmax(x2 @ w2.T + b2, axis=-1)
    assert out2.shape == (B2, S2, V2)
    assert jnp.allclose(out2, ref2, atol=1e-5, rtol=1e-5)

    print("KERNEL_OK")
</pallas_src>

<mosaic_0001>
module attributes {stable_mosaic.version = 11 : i64} {
  func.func @_lse_kernel(%arg0: i32, %arg1: i32, %arg2: memref<8x32xf32, #tpu.memory_space<vmem>>, %arg3: memref<32x128xf32, #tpu.memory_space<vmem>>, %arg4: memref<1x128xf32, #tpu.memory_space<vmem>>, %arg5: memref<8x1xf32, #tpu.memory_space<vmem>>, %arg6: memref<8x1xf32, #tpu.memory_space<vmem>>, %arg7: memref<8x1xf32, #tpu.memory_space<vmem>>) attributes {dimension_semantics = [#tpu.dimension_semantics<parallel>, #tpu.dimension_semantics<arbitrary>], iteration_bounds = array<i64: 2, 1>, scalar_prefetch = 0 : i64, scratch_operands = 2 : i64, tpu.core_type = #tpu.core_type<tc>, window_params = [{transform_indices = @transform_0, window_bounds = array<i64: 8, 32>}, {transform_indices = @transform_1, window_bounds = array<i64: 32, 128>}, {transform_indices = @transform_2, window_bounds = array<i64: 1, 128>}, {transform_indices = @transform_3, window_bounds = array<i64: 8, 1>}]} {
    %c0_i32 = arith.constant 0 : i32
    %0 = arith.cmpi eq, %arg1, %c0_i32 : i32
    %1 = arith.extui %0 : i1 to i32
    %c0_i32_0 = arith.constant 0 : i32
    %2 = arith.cmpi ne, %1, %c0_i32_0 : i32
    scf.if %2 {
      %cst_18 = arith.constant 0xFF800000 : f32
      %28 = vector.broadcast %cst_18 : f32 to vector<8x1xf32>
      %c0_19 = arith.constant 0 : index
      %c0_20 = arith.constant 0 : index
      %29 = vector.load %arg6[%c0_19, %c0_20] : memref<8x1xf32, #tpu.memory_space<vmem>>, vector<8x1xf32>
      tpu.vector_store %arg6[%c0_19, %c0_20], %28 {strides = array<i32>} : memref<8x1xf32, #tpu.memory_space<vmem>>, vector<8x1xf32>,
      %cst_21 = arith.constant 0.000000e+00 : f32
      %30 = vector.broadcast %cst_21 : f32 to vector<8x1xf32>
      %c0_22 = arith.constant 0 : index
      %c0_23 = arith.constant 0 : index
      %31 = vector.load %arg7[%c0_22, %c0_23] : memref<8x1xf32, #tpu.memory_space<vmem>>, vector<8x1xf32>
      tpu.vector_store %arg7[%c0_22, %c0_23], %30 {strides = array<i32>} : memref<8x1xf32, #tpu.memory_space<vmem>>, vector<8x1xf32>,
    } else {
    }
    %c0 = arith.constant 0 : index
    %c0_1 = arith.constant 0 : index
    %3 = vector.load %arg2[%c0, %c0_1] : memref<8x32xf32, #tpu.memory_space<vmem>>, vector<8x32xf32>
    %c0_2 = arith.constant 0 : index
    %c0_3 = arith.constant 0 : index
    %4 = vector.load %arg3[%c0_2, %c0_3] : memref<32x128xf32, #tpu.memory_space<vmem>>, vector<32x128xf32>
    %cst = arith.constant dense<0.000000e+00> : vector<8x128xf32>
    %5 = tpu.matmul %3, %4, %cst {dimension_numbers = #tpu.dot_dimension_numbers<[1], [0], [0], [1], [0, 0, 1, 1], [], []>} : vector<8x32xf32>, vector<32x128xf32>, vector<8x128xf32> -> vector<8x128xf32>
    %c0_4 = arith.constant 0 : index
    %c0_5 = arith.constant 0 : index
    %6 = vector.load %arg4[%c0_4, %c0_5] : memref<1x128xf32, #tpu.memory_space<vmem>>, vector<1x128xf32>
    %7 = vector.broadcast %6 : vector<1x128xf32> to vector<8x128xf32>
    %8 = arith.addf %5, %7 : vector<8x128xf32>
    %c0_6 = arith.constant 0 : index
    %c0_7 = arith.constant 0 : index
    %9 = vector.load %arg6[%c0_6, %c0_7] : memref<8x1xf32, #tpu.memory_space<vmem>>, vector<8x1xf32>
    %cst_8 = arith.constant dense<0xFF800000> : vector<8xf32>
    %10 = vector.multi_reduction <maximumf>, %8, %cst_8 [1] : vector<8x128xf32> to vector<8xf32>
    %11 = vector.shape_cast %10 : vector<8xf32> to vector<8x1xf32>
    %12 = arith.maximumf %9, %11 : vector<8x1xf32>
    %c0_9 = arith.constant 0 : index
    %c0_10 = arith.constant 0 : index
    %13 = vector.load %arg7[%c0_9, %c0_10] : memref<8x1xf32, #tpu.memory_space<vmem>>, vector<8x1xf32>
    %14 = arith.subf %9, %12 : vector<8x1xf32>
    %15 = math.exp %14 : vector<8x1xf32>
    %16 = arith.mulf %13, %15 : vector<8x1xf32>
    %17 = vector.broadcast %12 : vector<8x1xf32> to vector<8x128xf32>
    %18 = arith.subf %8, %17 : vector<8x128xf32>
    %19 = math.exp %18 : vector<8x128xf32>
    %cst_11 = arith.constant dense<0.000000e+00> : vector<8xf32>
    %20 = vector.multi_reduction <add>, %19, %cst_11 [1] : vector<8x128xf32> to vector<8xf32>
    %21 = vector.shape_cast %20 : vector<8xf32> to vector<8x1xf32>
    %22 = arith.addf %16, %21 : vector<8x1xf32>
    %c0_12 = arith.constant 0 : index
    %c0_13 = arith.constant 0 : index
    %23 = vector.load %arg7[%c0_12, %c0_13] : memref<8x1xf32, #tpu.memory_space<vmem>>, vector<8x1xf32>
    tpu.vector_store %arg7[%c0_12, %c0_13], %22 {strides = array<i32>} : memref<8x1xf32, #tpu.memory_space<vmem>>, vector<8x1xf32>,
    %c0_14 = arith.constant 0 : index
    %c0_15 = arith.constant 0 : index
    %24 = vector.load %arg6[%c0_14, %c0_15] : memref<8x1xf32, #tpu.memory_space<vmem>>, vector<8x1xf32>
    tpu.vector_store %arg6[%c0_14, %c0_15], %12 {strides = array<i32>} : memref<8x1xf32, #tpu.memory_space<vmem>>, vector<8x1xf32>,
    %c0_i32_16 = arith.constant 0 : i32
    %25 = arith.cmpi eq, %arg1, %c0_i32_16 : i32
    %26 = arith.extui %25 : i1 to i32
    %c0_i32_17 = arith.constant 0 : i32
    %27 = arith.cmpi ne, %26, %c0_i32_17 : i32
    scf.if %27 {
      %c0_18 = arith.constant 0 : index
      %c0_19 = arith.constant 0 : index
      %28 = vector.load %arg6[%c0_18, %c0_19] : memref<8x1xf32, #tpu.memory_space<vmem>>, vector<8x1xf32>
      %c0_20 = arith.constant 0 : index
      %c0_21 = arith.constant 0 : index
      %29 = vector.load %arg7[%c0_20, %c0_21] : memref<8x1xf32, #tpu.memory_space<vmem>>, vector<8x1xf32>
      %30 = math.log %29 : vector<8x1xf32>
      %31 = arith.addf %28, %30 : vector<8x1xf32>
      %c0_22 = arith.constant 0 : index
      %c0_23 = arith.constant 0 : index
      %32 = vector.load %arg5[%c0_22, %c0_23] : memref<8x1xf32, #tpu.memory_space<vmem>>, vector<8x1xf32>
      tpu.vector_store %arg5[%c0_22, %c0_23], %31 {strides = array<i32>} : memref<8x1xf32, #tpu.memory_space<vmem>>, vector<8x1xf32>,
    } else {
    }
    return
  }
  func.func @transform_0(%arg0: i32, %arg1: i32) -> (i32, i32) {
    %c0_i32 = arith.constant 0 : i32
    %c0_i32_0 = arith.constant 0 : i32
    return %arg0, %c0_i32 : i32, i32
  }
  func.func @transform_1(%arg0: i32, %arg1: i32) -> (i32, i32) {
    %c0_i32 = arith.constant 0 : i32
    %c0_i32_0 = arith.constant 0 : i32
    return %c0_i32, %arg1 : i32, i32
  }
  func.func @transform_2(%arg0: i32, %arg1: i32) -> (i32, i32) {
    %c0_i32 = arith.constant 0 : i32
    %c0_i32_0 = arith.constant 0 : i32
    return %c0_i32, %arg1 : i32, i32
  }
  func.func @transform_3(%arg0: i32, %arg1: i32) -> (i32, i32) {
    %c0_i32 = arith.constant 0 : i32
    %c0_i32_0 = arith.constant 0 : i32
    return %arg0, %c0_i32 : i32, i32
  }
}

</mosaic_0001>

<llo_original>
// kernel: tpu_custom_call.1
$region0: #{tpu_custom_call.1}
  #allocation0 [shape = 'u32[]', space=smem, size = 0x4, offset = 0x4, fixed_abs, tag = 'smem constant byte address 0x4 - core index']
  #allocation1 [shape = 'u32[72,128]{1,0:T(1,128)}', space=vmem, size = 0x9000, scoped, tag = 'internal scratch']
  #allocation2 [shape = 'f32[8,1]{1,0:T(8,128)}', space=vmem, size = 0x1000, scoped, tag = 'scratch operand']
  #allocation3 [shape = 'f32[8,1]{1,0:T(8,128)}', space=vmem, size = 0x1000, scoped, tag = 'scratch operand']
  %s0 = inlined_call_operand.hbm [shape: f32[16,32], index: 0, kind: input, shape index: {}]
  %s1 = inlined_call_operand.hbm [shape: f32[32,128], index: 1, kind: input, shape index: {}]
  %s2 = inlined_call_operand.vmem [shape: f32[1,128], index: 2, kind: input, shape index: {}]
  %s3 = inlined_call_operand.vmem [shape: f32[16,1], index: 3, kind: output, shape index: {}]
  %s4 = sld [smem:[#allocation0]]
  $region61: #{tpu_custom_call.1} parent=0
    _
  %s6 = ssub.s32 1, %s4
  %s7 = scalar_select 0, %s6, %s4
  $region1: #{tpu_custom_call.1} parent=0
    #allocation4 [shape = 'u8[8192]{0}', space=vmem, size = 0x2000, scoped, tag = 'input window, operand 0']
    #allocation5 [shape = 's32[2]{0}', space=sflag, size = 0x8, scoped, tag = 'scoped memory for tpu_custom_call.1']
    #allocation6 [shape = 'u8[16384]{0}', space=vmem, size = 0x4000, scoped, tag = 'input window, operand 1, single buffered']
    #allocation7 [shape = 's32[1]{0}', space=sflag, size = 0x4, scoped, tag = 'scoped memory for tpu_custom_call.1']
    %8 = vsyncpa [#allocation5], 0
    %s9 = scalar_lea.sflag [#allocation5], 1
    %10 = vsyncpa %s9, 0
    %11 = vsyncpa [#allocation7], 0
    loop: start=0, step=1, limit=4
    $region2: #{tpu_custom_call.1} parent=1 // loop_pre_header
      _
    $region3: #{tpu_custom_call.1} parent=1 // loop_header
      %s13 = sphi 0, %s17
      %p14 = scmp.ge.s32.totalorder %s13, 4
      %s20 = sphi 0, %s32
      %s21 = sphi 0, %s28
      %s22 = sphi 0, %s20
      %s23 = sphi 0, %s21
      %s24 = sphi 0, %s22
      %s25 = sphi 0, %s23
      %s35 = sphi 0, %s37
      %s38 = sphi 0, %s35
      %s39 = sphi 0, %s38
      %s55 = sphi 0, %s39
      %s61 = sphi 0, %s63
      %s64 = sphi 0, %s61
      %s65 = sphi 0, %s64
      %s81 = sphi 0, %s65
      %s87 = sphi 0, %s89
      %s90 = sphi 0, %s87
      %s91 = sphi 0, %s90
      %s107 = sphi 0, %s91
      %s113 = sphi 0, %s115
      %s116 = sphi 0, %s113
      %s117 = sphi 0, %s116
      %s133 = sphi 0, %s117
    $region4: #{tpu_custom_call.1} parent=1 // loop_header_branch
      %16 = sbr.rel (%p14) target = $region8
    $region5: #{tpu_custom_call.1} parent=1 // loop_body
      %s18 = ssub.s32 %s13, 1
      %s19 = ssub.s32 %s13, 2
      %s26 = sadd.s32 1, %s21
      %p27 = scmp.ge.s32.totalorder %s26, 1
      %s28 = scalar_select %p27, 0, %s26
      %s29 = sadd.s32 1, %s20
      %s30 = scalar_select %p27, %s29, %s20
      %p31 = scmp.ge.s32.totalorder %s30, 2
      %s32 = scalar_select %p31, 0, %s30
      %s33 = ssub.s32 %s20, %s32
      %p34 = scmp.eq.s32.totalorder %s33, 0
      %s36 = sadd.s32 %s35, 1
      %s37 = scalar_select %p34, %s35, %s36
      %p40 = pneg %p34
      %p41 = scmp.eq.s32.totalorder %s13, 1
      %p42 = por %p40, %p41
      %p43 = scmp.ne.s32.totalorder %s35, %s38
      %p44 = scmp.eq.s32.totalorder %s13, 0
      %p45 = por %p43, %p44
      %p46 = scmp.ne.s32.totalorder %s35, %s38
      %p47 = scmp.eq.s32.totalorder %s18, 1
      %p48 = por %p46, %p47
      %p49 = scmp.ne.s32.totalorder %s38, %s39
      %p50 = scmp.eq.s32.totalorder %s18, 0
      %p51 = por %p49, %p50
      %p52 = scmp.ne.s32.totalorder %s38, %s39
      %p53 = scmp.eq.s32.totalorder %s19, 1
      %p54 = por %p52, %p53
      %p56 = scmp.ne.s32.totalorder %s39, %s55
      %p57 = scmp.eq.s32.totalorder %s19, 0
      %p58 = por %p56, %p57
      %s59 = ssub.s32 %s21, %s28
      %p60 = scmp.eq.s32.totalorder %s59, 0
      %s62 = sadd.s32 %s61, 1
      %s63 = scalar_select %p60, %s61, %s62
      %p66 = pneg %p60
      %p67 = scmp.eq.s32.totalorder %s13, 1
      %p68 = por %p66, %p67
      %p69 = scmp.ne.s32.totalorder %s61, %s64
      %p70 = scmp.eq.s32.totalorder %s13, 0
      %p71 = por %p69, %p70
      %p72 = scmp.ne.s32.totalorder %s61, %s64
      %p73 = scmp.eq.s32.totalorder %s18, 1
      %p74 = por %p72, %p73
      %p75 = scmp.ne.s32.totalorder %s64, %s65
      %p76 = scmp.eq.s32.totalorder %s18, 0
      %p77 = por %p75, %p76
      %p78 = scmp.ne.s32.totalorder %s64, %s65
      %p79 = scmp.eq.s32.totalorder %s19, 1
      %p80 = por %p78, %p79
      %p82 = scmp.ne.s32.totalorder %s65, %s81
      %p83 = scmp.eq.s32.totalorder %s19, 0
      %p84 = por %p82, %p83
      %s85 = ssub.s32 %s21, %s28
      %p86 = scmp.eq.s32.totalorder %s85, 0
      %s88 = sadd.s32 %s87, 1
      %s89 = scalar_select %p86, %s87, %s88
      %p92 = pneg %p86
      %p93 = scmp.eq.s32.totalorder %s13, 1
      %p94 = por %p92, %p93
      %p95 = scmp.ne.s32.totalorder %s87, %s90
      %p96 = scmp.eq.s32.totalorder %s13, 0
      %p97 = por %p95, %p96
      %p98 = scmp.ne.s32.totalorder %s87, %s90
      %p99 = scmp.eq.s32.totalorder %s18, 1
      %p100 = por %p98, %p99
      %p101 = scmp.ne.s32.totalorder %s90, %s91
      %p102 = scmp.eq.s32.totalorder %s18, 0
      %p103 = por %p101, %p102
      %p104 = scmp.ne.s32.totalorder %s90, %s91
      %p105 = scmp.eq.s32.totalorder %s19, 1
      %p106 = por %p104, %p105
      %p108 = scmp.ne.s32.totalorder %s91, %s107
      %p109 = scmp.eq.s32.totalorder %s19, 0
      %p110 = por %p108, %p109
      %s111 = ssub.s32 %s20, %s32
      %p112 = scmp.eq.s32.totalorder %s111, 0
      %s114 = sadd.s32 %s113, 1
      %s115 = scalar_select %p112, %s113, %s114
      %p118 = pneg %p112
      %p119 = scmp.eq.s32.totalorder %s13, 1
      %p120 = por %p118, %p119
      %p121 = scmp.ne.s32.totalorder %s113, %s116
      %p122 = scmp.eq.s32.totalorder %s13, 0
      %p123 = por %p121, %p122
      %p124 = scmp.ne.s32.totalorder %s113, %s116
      %p125 = scmp.eq.s32.totalorder %s18, 1
      %p126 = por %p124, %p125
      %p127 = scmp.ne.s32.totalorder %s116, %s117
      %p128 = scmp.eq.s32.totalorder %s18, 0
      %p129 = por %p127, %p128
      %p130 = scmp.ne.s32.totalorder %s116, %s117
      %p131 = scmp.eq.s32.totalorder %s19, 1
      %p132 = por %p130, %p131
      %p134 = scmp.ne.s32.totalorder %s117, %s133
      %p135 = scmp.eq.s32.totalorder %s19, 0
      %p136 = por %p134, %p135
      %p137 = scmp.le.s32.totalorder 1, %s13
      %p138 = scmp.lt.s32.totalorder %s13, 3
      %p139 = pnand %p137, %p138
      %p140 = pneg %p139
      // Predicated region
      $region9: #{tpu_custom_call.1} parent=5 // pred_check
        _
      $region10: #{tpu_custom_call.1} parent=5 // pred_check_branch
        %142 = sbr.rel (%p139) target = $region12
      $region11: #{tpu_custom_call.1} parent=5 // pred_region
        %s143 = ssub.s32 %s13, 1
        // Predicated region
        $region13: #{tpu_custom_call.1} parent=11 // pred_check
          %p144 = pneg %p77
        $region14: #{tpu_custom_call.1} parent=11 // pred_check_branch
          %146 = sbr.rel (%p144) target = $region16
        $region15: #{tpu_custom_call.1} parent=11 // pred_region
          %148 = vsyncadd [#allocation7], 0
          %s149 = smul.addr %s23, 8
          %s150 = scalar_lea.hbm %s1, %s149
          %s151 = sshll.u32 %s150, 4
          %s152 = int_to_ptr.hbm [resolvable:$true] %s151
          %s153 = sshll.u32 [#allocation6], 4
          %s154 = int_to_ptr.vmem [resolvable:$true] %s153
          %159 = dma.hbm_to_vmem [thread:$0]  %s152, 512, %s154, [#allocation7], 128, 128, 8
        $region16: #{tpu_custom_call.1} parent=11 // pred_fallthru
          _
        // Predicated region
        $region17: #{tpu_custom_call.1} parent=11 // pred_check
          %p160 = pneg %p103
        $region18: #{tpu_custom_call.1} parent=11 // pred_check_branch
          %162 = sbr.rel (%p160) target = $region20
        $region19: #{tpu_custom_call.1} parent=11 // pred_region
          %p163 = scmp.lt.s32.totalorder %s23, 0
          %s164 = scalar_select %p163, %s23, 0
          %s165 = scalar_lea.vmem %s2, %s164
        $region20: #{tpu_custom_call.1} parent=11 // pred_fallthru
          _
      $region12: #{tpu_custom_call.1} parent=5 // pred_fallthru
        _
      %p166 = scmp.lt.s32.totalorder %s13, 2
      // Predicated region
      $region21: #{tpu_custom_call.1} parent=5 // pred_check
        %p167 = pneg %p166
      $region22: #{tpu_custom_call.1} parent=5 // pred_check_branch
        %169 = sbr.rel (%p167) target = $region24
      $region23: #{tpu_custom_call.1} parent=5 // pred_region
        // Predicated region
        $region25: #{tpu_custom_call.1} parent=23 // pred_check
          %p170 = pneg %p45
        $region26: #{tpu_custom_call.1} parent=23 // pred_check_branch
          %172 = sbr.rel (%p170) target = $region28
        $region27: #{tpu_custom_call.1} parent=23 // pred_region
          %s173 = sand.u32 %s35, 1
          %s174 = scalar_lea.sflag [#allocation5], %s173
          %s175 = sand.u32 %s35, 1
          %s176 = smul.addr %s175, 8
          %s177 = scalar_lea.vmem [#allocation4], %s176
          %179 = vsyncadd %s174, 0
          %s180 = smul.addr %s20, 8
          %s181 = scalar_lea.hbm %s0, %s180
          %s183 = sshll.u32 %s181, 4
          %s184 = int_to_ptr.hbm [resolvable:$true] %s183
          %s185 = sshll.u32 %s177, 4
          %s186 = int_to_ptr.vmem [resolvable:$true] %s185
          %188 = dma.hbm_to_vmem [thread:$0]  %s184, 128, %s186, %s174
        $region28: #{tpu_custom_call.1} parent=23 // pred_fallthru
          _
      $region24: #{tpu_custom_call.1} parent=5 // pred_fallthru
        _
      %p189 = scmp.le.s32.totalorder 1, %s13
      %p190 = scmp.lt.s32.totalorder %s13, 3
      %p191 = pnand %p189, %p190
      %p192 = pneg %p191
      // Predicated region
      $region29: #{tpu_custom_call.1} parent=5 // pred_check
        _
      $region30: #{tpu_custom_call.1} parent=5 // pred_check_branch
        %194 = sbr.rel (%p191) target = $region32
      $region31: #{tpu_custom_call.1} parent=5 // pred_region
        %s195 = ssub.s32 %s13, 1
        %s196 = sand.u32 %s38, 1
        %s197 = scalar_lea.sflag [#allocation5], %s196
        %s198 = sand.u32 %s38, 1
        %s199 = smul.addr %s198, 8
        %s200 = scalar_lea.vmem [#allocation4], %s199
        // Predicated region
        $region33: #{tpu_custom_call.1} parent=31 // pred_check
          %p201 = pneg %p51
        $region34: #{tpu_custom_call.1} parent=31 // pred_check_branch
          %203 = sbr.rel (%p201) target = $region36
        $region35: #{tpu_custom_call.1} parent=31 // pred_region
          %205 = dma.done %s197, 128
        $region36: #{tpu_custom_call.1} parent=31 // pred_fallthru
          _
        // Predicated region
        $region37: #{tpu_custom_call.1} parent=31 // pred_check
          %p206 = pneg %p77
        $region38: #{tpu_custom_call.1} parent=31 // pred_check_branch
          %208 = sbr.rel (%p206) target = $region40
        $region39: #{tpu_custom_call.1} parent=31 // pred_region
          %210 = dma.done [#allocation7], 512
        $region40: #{tpu_custom_call.1} parent=31 // pred_fallthru
          _
        %s211 = sand.u32 %s38, 1
        %s212 = scalar_lea.sflag [#allocation5], %s211
        %s213 = sand.u32 %s38, 1
        %s214 = smul.addr %s213, 8
        %s215 = scalar_lea.vmem [#allocation4], %s214
        %p216 = pneg %p51
        %p217 = pneg %p48
        %p218 = pneg %p77
        %p219 = pneg %p74
        %p220 = scmp.lt.s32.totalorder %s23, 0
        %s221 = scalar_select %p220, %s23, 0
        %s222 = scalar_lea.vmem %s2, %s221
        %p223 = pneg %p103
        %p224 = pneg %p100
        %p225 = pneg %p129
        %p226 = pneg %p126
        %p227 = scmp.lt.s32.totalorder %s22, 1
        %s228 = scalar_select %p227, %s22, 1
        %s229 = smul.addr %s228, 8
        %s230 = scalar_lea.vmem %s3, %s229
        %p231 = scmp.lt.s32.totalorder %s23, 0
        %s232 = scalar_select %p231, %s23, 0
        %s233 = scalar_lea.vmem %s2, %s232
        %p234 = scmp.lt.s32.totalorder %s22, 1
        %s235 = scalar_select %p234, %s22, 1
        %s236 = smul.addr %s235, 8
        %s237 = scalar_lea.vmem %s3, %s236
        %p238 = scmp.eq.s32.totalorder %s23, 0
        // Predicated region
        $region41: #{tpu_custom_call.1} parent=31 // pred_check
          %p239 = pneg %p238
        $region42: #{tpu_custom_call.1} parent=31 // pred_check_branch
          %241 = sbr.rel (%p239) target = $region44
        $region43: #{tpu_custom_call.1} parent=31 // pred_region
          %vm242 = vcmask 7168
          %243 = vst.msk [vmem:[#allocation2] sm:$0xff] %vm242, -inf
          %244 = vst.msk [vmem:[#allocation3] sm:$0xff] %vm242, 0.0
        $region44: #{tpu_custom_call.1} parent=31 // pred_fallthru
          _
        %v245 = vld [vmem:[%s200] sm:$0xff]
        %v246 = vld [vmem:[#allocation6] sm:$0xff]
        %v247 = vld [vmem:[#allocation6 + $0x8] sm:$0xff]
        %v248 = vld [vmem:[#allocation6 + $0x10] sm:$0xff]
        %v249 = vld [vmem:[#allocation6 + $0x18] sm:$0xff]
        %v250 = vld [vmem:[%s233] sm:$0x1]
        %v252 = vperm.slane %v250, 0
        %vm254 = vcmask 261120
        %v256 = vsel %vm254, %v245, 0
        %258 = vmatpush.msra.mxu0 0.0
        %259 = vmatpush.msra.mxu0 0.0
        %260 = vmatpush.msra.mxu0 0.0
        %261 = vmatpush.msra.mxu0 0.0
        %262 = vmatpush.msra.mxu0 0.0
        %263 = vmatpush.msra.mxu0 0.0
        %264 = vmatpush.msra.mxu0 0.0
        %265 = vmatpush.msra.mxu0 0.0
        %266 = vmatpush.msra.mxu0 0.0
        %267 = vmatpush.msra.mxu0 0.0
        %268 = vmatpush.msra.mxu0 0.0
        %269 = vmatpush.msra.mxu0 0.0
        %270 = vmatpush.msra.mxu0 %v249
        %271 = vmatpush.msra.mxu0 %v248
        %272 = vmatpush.msra.mxu0 %v247
        %273 = vmatpush.msra.mxu0 %v246
        %274 = vmatmul.f32.gmra.mxu0 %v256
        %v275 = vpop.f32.mrf.mxu0
        %v276 = vadd.f32 %v252, %v275
        %277 = vdwg.mxu0
        %v278 = vld [vmem:[#allocation2] sm:$0xff]
        %279 = vmax.xlane.f32.xlu0 %v276
        %v280 = vpop.xlane.xlu0 %279
        %v281 = vmax.f32 %v278, %v280
        %v282 = vld [vmem:[#allocation3] sm:$0xff]
        %v283 = vsub.f32 %v278, %v281
        %v284 = vmul.f32 %v283, 1.442695
        %v285 = vpow.pop %v284
        %v286 = vmul.f32 %v282, %v285
        %288 = vset.pattern.permute.xlu0 0
        %289 = vperm.xlu0 %288, %v281
        %v290 = vpop.permute.xlu0 %289
        %v292 = vsub.f32 %v276, %v290
        %v293 = vmul.f32 %v292, 1.442695
        %v294 = vpow.pop %v293
        %295 = vadd.xlane.f32.xlu0 %v294
        %v296 = vpop.xlane.xlu0 %295
        %v297 = vadd.f32 %v286, %v296
        %vm298 = vcmask 7168
        %299 = vst.msk [vmem:[#allocation3] sm:$0xff] %vm298, %v297
        %300 = vst.msk [vmem:[#allocation2] sm:$0xff] %vm298, %v281
        // Predicated region
        $region45: #{tpu_custom_call.1} parent=31 // pred_check
          %p301 = pneg %p238
        $region46: #{tpu_custom_call.1} parent=31 // pred_check_branch
          %303 = sbr.rel (%p301) target = $region48
        $region47: #{tpu_custom_call.1} parent=31 // pred_region
          %v304 = vld [vmem:[#allocation2] sm:$0xff]
          %v305 = vld [vmem:[#allocation3] sm:$0xff]
          %v306 = vlog2.pop %v305
          %v307 = vmul.f32 %v306, 0.6931472
          %v308 = vadd.f32 %v304, %v307
          %309 = vst.msk [vmem:[%s237] sm:$0xff] %vm298, %v308
        $region48: #{tpu_custom_call.1} parent=31 // pred_fallthru
          _
        %p310 = scmp.lt.s32.totalorder %s22, 1
        %s311 = scalar_select %p310, %s22, 1
        %s312 = smul.addr %s311, 8
        %s313 = scalar_lea.vmem %s3, %s312
        // Predicated region
        $region49: #{tpu_custom_call.1} parent=31 // pred_check
          %p314 = pneg %p126
        $region50: #{tpu_custom_call.1} parent=31 // pred_check_branch
          %316 = sbr.rel (%p314) target = $region52
        $region51: #{tpu_custom_call.1} parent=31 // pred_region
          _
        $region52: #{tpu_custom_call.1} parent=31 // pred_fallthru
          _
      $region32: #{tpu_custom_call.1} parent=5 // pred_fallthru
        _
      %p317 = scmp.le.s32.totalorder 2, %s13
      // Predicated region
      $region53: #{tpu_custom_call.1} parent=5 // pred_check
        %p318 = pneg %p317
      $region54: #{tpu_custom_call.1} parent=5 // pred_check_branch
        %320 = sbr.rel (%p318) target = $region56
      $region55: #{tpu_custom_call.1} parent=5 // pred_region
        %s321 = ssub.s32 %s13, 2
        // Predicated region
        $region57: #{tpu_custom_call.1} parent=55 // pred_check
          %p322 = pneg %p132
        $region58: #{tpu_custom_call.1} parent=55 // pred_check_branch
          %324 = sbr.rel (%p322) target = $region60
        $region59: #{tpu_custom_call.1} parent=55 // pred_region
          %p325 = scmp.lt.s32.totalorder %s24, 1
          %s326 = scalar_select %p325, %s24, 1
          %s327 = smul.addr %s326, 8
          %s328 = scalar_lea.vmem %s3, %s327
        $region60: #{tpu_custom_call.1} parent=55 // pred_fallthru
          _
      $region56: #{tpu_custom_call.1} parent=5 // pred_fallthru
        _
    $region6: #{tpu_custom_call.1} parent=1 // loop_footer
      %s17 = sadd.s32 1, %s13
    $region7: #{tpu_custom_call.1} parent=1 // loop_footer_branch
      %12 = sbr.rel target = $region3
    $region8: #{tpu_custom_call.1} parent=1 // loop_exit
      _
    %329 = vsyncpa [#allocation5], 1
    %s330 = scalar_lea.sflag [#allocation5], 1
    %331 = vsyncpa %s330, 1
    %332 = vsyncpa [#allocation7], 1

</llo_original>
